<compile_context>
chip_gen: v7x
topology: tpu7x:2x2x1
jax: 0.10.0
libtpu: 0.0.40
codegen_flags: <defaults>
</compile_context>

<pallas_src>
import functools

import jax
import jax.numpy as jnp
from jax import lax
from jax.experimental import pallas as pl
from jax.experimental.pallas import tpu as pltpu

KAPPA_WEIGHT = 1.0
BETA_WEIGHT = 1.0

_SUBLANE = 8
_LANE = 128
_VREG_ELEMS = _SUBLANE * _LANE   # 1024 f32 elements per (8, 128) vreg
_MAX_GTILE = 256                 # 256 vregs = 1 MiB per input per grid step


def _kent_loss_kernel(p_ref, t_ref, out_ref, acc_d2_ref, acc_abs_ref, *,
                      inv_n, kappa_weight, beta_weight):
    """p_ref/t_ref: (gtile, 8, 128) VMEM; out_ref: (4,) SMEM; acc_*: (8,128) VMEM."""
    i = pl.program_id(0)

    @pl.when(i == 0)
    def _init():
        acc_d2_ref[...] = jnp.zeros_like(acc_d2_ref)
        acc_abs_ref[...] = jnp.zeros_like(acc_abs_ref)

    p = p_ref[...]                         # (gtile, 8, 128) f32, lane-dense
    t = t_ref[...]
    d = p - t
    # Leading-axis sums are pure vreg-wise VPU adds (no XLU in the hot loop).
    acc_d2_ref[...] += jnp.sum(d * d, axis=0)
    acc_abs_ref[...] += jnp.sum(jnp.abs(p), axis=0)

    @pl.when(i == pl.num_programs(0) - 1)
    def _finalize():
        # Flat index parity == lane parity: even lane -> log_kappa, odd -> ratio.
        lane = lax.broadcasted_iota(jnp.int32, (_SUBLANE, _LANE), 1)
        even = (lane % 2) == 0

        d2 = acc_d2_ref[...]
        kappa_sum = jnp.sum(jnp.where(even, d2, 0.0))
        ratio_sum = jnp.sum(d2) - kappa_sum
        abs_sum = jnp.sum(jnp.where(even, acc_abs_ref[...], 0.0))

        kappa_loss = kappa_sum * inv_n
        ratio_loss = ratio_sum * inv_n
        kappa_reg = 0.01 * (abs_sum * inv_n)
        out_ref[0] = kappa_loss
        out_ref[1] = ratio_loss
        out_ref[2] = kappa_reg
        out_ref[3] = (kappa_weight * kappa_loss
                      + beta_weight * ratio_loss
                      + kappa_reg)


def kent_loss(pred, target, kappa_weight=KAPPA_WEIGHT, beta_weight=BETA_WEIGHT):
    """Returns (total_loss, stats_dict) matching KentLoss.forward semantics.

    Stats are device scalars (no blocking .item()/float() host syncs).
    """
    assert pred.shape == target.shape and pred.ndim == 2 and pred.shape[1] == 2
    n = pred.shape[0]
    two_n = 2 * n

    # Free (contiguous) flatten: [pk0, pr0, pk1, pr1, ...].
    p_flat = pred.astype(jnp.float32).reshape(-1)
    t_flat = target.astype(jnp.float32).reshape(-1)

    g_needed = pl.cdiv(two_n, _VREG_ELEMS)          # number of (8,128) vregs needed
    gtile = min(_MAX_GTILE, g_needed)               # vregs per grid step
    grid = pl.cdiv(g_needed, gtile)
    padded = grid * gtile * _VREG_ELEMS
    if padded != two_n:
        # Zero padding contributes exactly zero to all three sums.
        p_flat = jnp.pad(p_flat, (0, padded - two_n))
        t_flat = jnp.pad(t_flat, (0, padded - two_n))

    p3 = p_flat.reshape(grid * gtile, _SUBLANE, _LANE)
    t3 = t_flat.reshape(grid * gtile, _SUBLANE, _LANE)

    kernel = functools.partial(
        _kent_loss_kernel,
        inv_n=1.0 / n,                      # global N, applied once at finalize
        kappa_weight=float(kappa_weight),
        beta_weight=float(beta_weight),
    )

    out = pl.pallas_call(
        kernel,
        out_shape=jax.ShapeDtypeStruct((4,), jnp.float32),
        grid=(grid,),
        in_specs=[
            pl.BlockSpec((gtile, _SUBLANE, _LANE), lambda i: (i, 0, 0)),
            pl.BlockSpec((gtile, _SUBLANE, _LANE), lambda i: (i, 0, 0)),
        ],
        out_specs=pl.BlockSpec((4,), lambda i: (0,), memory_space=pltpu.SMEM),
        scratch_shapes=[
            pltpu.VMEM((_SUBLANE, _LANE), jnp.float32),
            pltpu.VMEM((_SUBLANE, _LANE), jnp.float32),
        ],
        compiler_params=pltpu.CompilerParams(
            dimension_semantics=("arbitrary",)),
    )(p3, t3)

    total = out[3]
    stats = {"kappa_loss": out[0], "ratio_loss": out[1], "kappa_reg": out[2]}
    return total, stats


def _reference(pred, target, kappa_weight=KAPPA_WEIGHT, beta_weight=BETA_WEIGHT):
    pk, pr = pred[:, 0], pred[:, 1]
    tk, tr = target[:, 0], target[:, 1]
    kl = jnp.mean((pk - tk) ** 2)
    rl = jnp.mean((pr - tr) ** 2)
    reg = 0.01 * jnp.mean(jnp.abs(pk))
    return kappa_weight * kl + beta_weight * rl + reg, kl, rl, reg


def _check(name, got, want):
    got = float(got)
    want = float(want)
    assert abs(got - want) < 1e-4 * max(1.0, abs(want)), (name, got, want)


if __name__ == "__main__":
    key = jax.random.PRNGKey(0)
    loss_fn = jax.jit(kent_loss)

    # n=8      : tiny case (single vreg, heavy zero-padding)
    # n=5000   : non-multiple-of-1024, single grid step
    # n=140000 : multiple grid steps -> exercises cross-block accumulation
    for n in (8, 5000, 140000):
        key, k1, k2 = jax.random.split(key, 3)
        pred = jax.random.normal(k1, (n, 2), dtype=jnp.float32)
        target = jax.random.normal(k2, (n, 2), dtype=jnp.float32)

        total, stats = loss_fn(pred, target)
        total = jax.block_until_ready(total)

        ref_total, ref_kl, ref_rl, ref_reg = _reference(pred, target)
        _check("total", total, jax.block_until_ready(ref_total))
        _check("kappa_loss", stats["kappa_loss"], ref_kl)
        _check("ratio_loss", stats["ratio_loss"], ref_rl)
        _check("kappa_reg", stats["kappa_reg"], ref_reg)

    print("KERNEL_OK")
</pallas_src>

<mosaic_0001>
module attributes {stable_mosaic.version = 11 : i64} {
  func.func @_kent_loss_kernel(%arg0: i32, %arg1: memref<1x8x128xf32, #tpu.memory_space<vmem>>, %arg2: memref<1x8x128xf32, #tpu.memory_space<vmem>>, %arg3: memref<4xf32, #tpu.memory_space<smem>>, %arg4: memref<8x128xf32, #tpu.memory_space<vmem>>, %arg5: memref<8x128xf32, #tpu.memory_space<vmem>>) attributes {dimension_semantics = [#tpu.dimension_semantics<arbitrary>], iteration_bounds = array<i64: 1>, scalar_prefetch = 0 : i64, scratch_operands = 2 : i64, tpu.core_type = #tpu.core_type<tc>, window_params = [{transform_indices = @transform_0, window_bounds = array<i64: 1, 8, 128>}, {transform_indices = @transform_1, window_bounds = array<i64: 1, 8, 128>}, {transform_indices = @transform_2, window_bounds = array<i64: 4>}]} {
    %c0_i32 = arith.constant 0 : i32
    %0 = arith.cmpi eq, %arg0, %c0_i32 : i32
    %1 = arith.extui %0 : i1 to i32
    %c0_i32_0 = arith.constant 0 : i32
    %2 = arith.cmpi ne, %1, %c0_i32_0 : i32
    scf.if %2 {
      %cst_17 = arith.constant 0.000000e+00 : f32
      %19 = vector.broadcast %cst_17 : f32 to vector<8x128xf32>
      %c0_18 = arith.constant 0 : index
      %c0_19 = arith.constant 0 : index
      %20 = vector.load %arg4[%c0_18, %c0_19] : memref<8x128xf32, #tpu.memory_space<vmem>>, vector<8x128xf32>
      tpu.vector_store %arg4[%c0_18, %c0_19], %19 {strides = array<i32>} : memref<8x128xf32, #tpu.memory_space<vmem>>, vector<8x128xf32>,
      %cst_20 = arith.constant 0.000000e+00 : f32
      %21 = vector.broadcast %cst_20 : f32 to vector<8x128xf32>
      %c0_21 = arith.constant 0 : index
      %c0_22 = arith.constant 0 : index
      %22 = vector.load %arg5[%c0_21, %c0_22] : memref<8x128xf32, #tpu.memory_space<vmem>>, vector<8x128xf32>
      tpu.vector_store %arg5[%c0_21, %c0_22], %21 {strides = array<i32>} : memref<8x128xf32, #tpu.memory_space<vmem>>, vector<8x128xf32>,
    } else {
    }
    %c0 = arith.constant 0 : index
    %c0_1 = arith.constant 0 : index
    %c0_2 = arith.constant 0 : index
    %3 = vector.load %arg1[%c0, %c0_1, %c0_2] : memref<1x8x128xf32, #tpu.memory_space<vmem>>, vector<1x8x128xf32>
    %c0_3 = arith.constant 0 : index
    %c0_4 = arith.constant 0 : index
    %c0_5 = arith.constant 0 : index
    %4 = vector.load %arg2[%c0_3, %c0_4, %c0_5] : memref<1x8x128xf32, #tpu.memory_space<vmem>>, vector<1x8x128xf32>
    %5 = arith.subf %3, %4 : vector<1x8x128xf32>
    %c0_6 = arith.constant 0 : index
    %c0_7 = arith.constant 0 : index
    %6 = vector.load %arg4[%c0_6, %c0_7] : memref<8x128xf32, #tpu.memory_space<vmem>>, vector<8x128xf32>
    %7 = arith.mulf %5, %5 : vector<1x8x128xf32>
    %cst = arith.constant dense<0.000000e+00> : vector<8x128xf32>
    %8 = vector.multi_reduction <add>, %7, %cst [0] : vector<1x8x128xf32> to vector<8x128xf32>
    %9 = arith.addf %6, %8 : vector<8x128xf32>
    %c0_8 = arith.constant 0 : index
    %c0_9 = arith.constant 0 : index
    %10 = vector.load %arg4[%c0_8, %c0_9] : memref<8x128xf32, #tpu.memory_space<vmem>>, vector<8x128xf32>
    tpu.vector_store %arg4[%c0_8, %c0_9], %9 {strides = array<i32>} : memref<8x128xf32, #tpu.memory_space<vmem>>, vector<8x128xf32>,
    %c0_10 = arith.constant 0 : index
    %c0_11 = arith.constant 0 : index
    %11 = vector.load %arg5[%c0_10, %c0_11] : memref<8x128xf32, #tpu.memory_space<vmem>>, vector<8x128xf32>
    %12 = math.absf %3 : vector<1x8x128xf32>
    %cst_12 = arith.constant dense<0.000000e+00> : vector<8x128xf32>
    %13 = vector.multi_reduction <add>, %12, %cst_12 [0] : vector<1x8x128xf32> to vector<8x128xf32>
    %14 = arith.addf %11, %13 : vector<8x128xf32>
    %c0_13 = arith.constant 0 : index
    %c0_14 = arith.constant 0 : index
    %15 = vector.load %arg5[%c0_13, %c0_14] : memref<8x128xf32, #tpu.memory_space<vmem>>, vector<8x128xf32>
    tpu.vector_store %arg5[%c0_13, %c0_14], %14 {strides = array<i32>} : memref<8x128xf32, #tpu.memory_space<vmem>>, vector<8x128xf32>,
    %c0_i32_15 = arith.constant 0 : i32
    %16 = arith.cmpi eq, %arg0, %c0_i32_15 : i32
    %17 = arith.extui %16 : i1 to i32
    %c0_i32_16 = arith.constant 0 : i32
    %18 = arith.cmpi ne, %17, %c0_i32_16 : i32
    scf.if %18 {
      %19 = tpu.iota {dimensions = array<i32: 1>} : vector<8x128xi32>
      %c2_i32 = arith.constant 2 : i32
      %c0_i32_17 = arith.constant 0 : i32
      %20 = arith.cmpi eq, %c2_i32, %c0_i32_17 : i32
      %c1_i32 = arith.constant 1 : i32
      %21 = arith.select %20, %c1_i32, %c2_i32 : i32
      %22 = vector.broadcast %21 : i32 to vector<8x128xi32>
      %23 = arith.remsi %19, %22 : vector<8x128xi32>
      %c0_i32_18 = arith.constant 0 : i32
      %24 = vector.broadcast %c0_i32_18 : i32 to vector<8x128xi32>
      %25 = arith.cmpi ne, %23, %24 : vector<8x128xi32>
      %c0_i32_19 = arith.constant 0 : i32
      %26 = vector.broadcast %c0_i32_19 : i32 to vector<8x128xi32>
      %27 = arith.cmpi slt, %23, %26 : vector<8x128xi32>
      %c0_i32_20 = arith.constant 0 : i32
      %28 = arith.cmpi slt, %21, %c0_i32_20 : i32
      %29 = vector.broadcast %28 : i1 to vector<8x128xi1>
      %30 = vector.broadcast %29 : vector<8x128xi1> to vector<8x128xi1>
      %31 = arith.xori %27, %30 : vector<8x128xi1>
      %32 = arith.andi %31, %25 : vector<8x128xi1>
      %33 = vector.broadcast %21 : i32 to vector<8x128xi32>
      %34 = arith.addi %23, %33 : vector<8x128xi32>
      %35 = arith.select %32, %34, %23 : vector<8x128xi1>, vector<8x128xi32>
      %c0_i32_21 = arith.constant 0 : i32
      %36 = vector.broadcast %c0_i32_21 : i32 to vector<8x128xi32>
      %37 = arith.cmpi eq, %35, %36 : vector<8x128xi32>
      %c0_22 = arith.constant 0 : index
      %c0_23 = arith.constant 0 : index
      %38 = vector.load %arg4[%c0_22, %c0_23] : memref<8x128xf32, #tpu.memory_space<vmem>>, vector<8x128xf32>
      %cst_24 = arith.constant 0.000000e+00 : f32
      %39 = vector.broadcast %cst_24 : f32 to vector<8x128xf32>
      %40 = arith.select %37, %38, %39 : vector<8x128xi1>, vector<8x128xf32>
      %41 = vector.shape_cast %40 : vector<8x128xf32> to vector<1x8x128xf32>
      %cst_25 = arith.constant dense<0.000000e+00> : vector<1xf32>
      %42 = vector.multi_reduction <add>, %41, %cst_25 [1, 2] : vector<1x8x128xf32> to vector<1xf32>
      %43 = vector.shape_cast %42 : vector<1xf32> to vector<1x1x1xf32>
      %44 = vector.extract %43[0, 0, 0] : f32 from vector<1x1x1xf32>
      %45 = vector.shape_cast %38 : vector<8x128xf32> to vector<1x8x128xf32>
      %cst_26 = arith.constant dense<0.000000e+00> : vector<1xf32>
      %46 = vector.multi_reduction <add>, %45, %cst_26 [1, 2] : vector<1x8x128xf32> to vector<1xf32>
      %47 = vector.shape_cast %46 : vector<1xf32> to vector<1x1x1xf32>
      %48 = vector.extract %47[0, 0, 0] : f32 from vector<1x1x1xf32>
      %49 = arith.subf %48, %44 : f32
      %c0_27 = arith.constant 0 : index
      %c0_28 = arith.constant 0 : index
      %50 = vector.load %arg5[%c0_27, %c0_28] : memref<8x128xf32, #tpu.memory_space<vmem>>, vector<8x128xf32>
      %cst_29 = arith.constant 0.000000e+00 : f32
      %51 = vector.broadcast %cst_29 : f32 to vector<8x128xf32>
      %52 = arith.select %37, %50, %51 : vector<8x128xi1>, vector<8x128xf32>
      %53 = vector.shape_cast %52 : vector<8x128xf32> to vector<1x8x128xf32>
      %cst_30 = arith.constant dense<0.000000e+00> : vector<1xf32>
      %54 = vector.multi_reduction <add>, %53, %cst_30 [1, 2] : vector<1x8x128xf32> to vector<1xf32>
      %55 = vector.shape_cast %54 : vector<1xf32> to vector<1x1x1xf32>
      %56 = vector.extract %55[0, 0, 0] : f32 from vector<1x1x1xf32>
      %cst_31 = arith.constant 1.250000e-01 : f32
      %57 = arith.mulf %44, %cst_31 : f32
      %cst_32 = arith.constant 1.250000e-01 : f32
      %58 = arith.mulf %49, %cst_32 : f32
      %cst_33 = arith.constant 1.250000e-01 : f32
      %59 = arith.mulf %56, %cst_33 : f32
      %cst_34 = arith.constant 0.00999999977 : f32
      %60 = arith.mulf %cst_34, %59 : f32
      %c0_35 = arith.constant 0 : index
      %61 = memref.load %arg3[%c0_35] : memref<4xf32, #tpu.memory_space<smem>>
      memref.store %57, %arg3[%c0_35] : memref<4xf32, #tpu.memory_space<smem>>
      %c1 = arith.constant 1 : index
      %62 = memref.load %arg3[%c1] : memref<4xf32, #tpu.memory_space<smem>>
      memref.store %58, %arg3[%c1] : memref<4xf32, #tpu.memory_space<smem>>
      %c2 = arith.constant 2 : index
      %63 = memref.load %arg3[%c2] : memref<4xf32, #tpu.memory_space<smem>>
      memref.store %60, %arg3[%c2] : memref<4xf32, #tpu.memory_space<smem>>
      %cst_36 = arith.constant 1.000000e+00 : f32
      %64 = arith.mulf %cst_36, %57 : f32
      %cst_37 = arith.constant 1.000000e+00 : f32
      %65 = arith.mulf %cst_37, %58 : f32
      %66 = arith.addf %64, %65 : f32
      %67 = arith.addf %66, %60 : f32
      %c3 = arith.constant 3 : index
      %68 = memref.load %arg3[%c3] : memref<4xf32, #tpu.memory_space<smem>>
      memref.store %67, %arg3[%c3] : memref<4xf32, #tpu.memory_space<smem>>
    } else {
    }
    return
  }
  func.func @transform_0(%arg0: i32) -> (i32, i32, i32) {
    %c0_i32 = arith.constant 0 : i32
    %c0_i32_0 = arith.constant 0 : i32
    %c0_i32_1 = arith.constant 0 : i32
    return %arg0, %c0_i32, %c0_i32_0 : i32, i32, i32
  }
  func.func @transform_1(%arg0: i32) -> (i32, i32, i32) {
    %c0_i32 = arith.constant 0 : i32
    %c0_i32_0 = arith.constant 0 : i32
    %c0_i32_1 = arith.constant 0 : i32
    return %arg0, %c0_i32, %c0_i32_0 : i32, i32, i32
  }
  func.func @transform_2(%arg0: i32) -> i32 {
    %c0_i32 = arith.constant 0 : i32
    %c0_i32_0 = arith.constant 0 : i32
    return %c0_i32 : i32
  }
}

</mosaic_0001>

<llo_original>
// kernel: kent_loss.1
$region0: #{kent_loss.1}
  #allocation0 [shape = 'u32[]', space=smem, size = 0x4, offset = 0x4, fixed_abs, tag = 'smem constant byte address 0x4 - core index']
  #allocation1 [shape = 'u32[144,128]{1,0:T(1,128)}', space=vmem, size = 0x12000, scoped, tag = 'internal scratch']
  #allocation2 [shape = 'f32[8,128]{1,0:T(8,128)}', space=vmem, size = 0x1000, scoped, tag = 'scratch operand']
  #allocation3 [shape = 'f32[8,128]{1,0:T(8,128)}', space=vmem, size = 0x1000, scoped, tag = 'scratch operand']
  %s0 = inlined_call_operand.vmem [shape: f32[1,8,128], index: 0, kind: input, shape index: {}]
  %s1 = inlined_call_operand.vmem [shape: f32[1,8,128], index: 1, kind: input, shape index: {}]
  %s2 = inlined_call_operand.vmem [shape: f32[4], index: 2, kind: output, shape index: {}]
  %s3 = sld [smem:[#allocation0]]
  $region26: #{kent_loss.1} parent=0
    _
  %s5 = ssub.s32 1, %s3
  %s6 = scalar_select 0, %s5, %s3
  $region1: #{kent_loss.1} parent=0
    #allocation4 [shape = 'u8[512]{0}', space=smem, size = 0x200, scoped, tag = 'output window, operand 0, single buffered']
    #allocation5 [shape = 's32[1]{0}', space=sflag, size = 0x4, scoped, tag = 'scoped memory for kent_loss.1']
    %7 = vsyncpa [#allocation5], 0
    // Predicated region
    $region2: #{kent_loss.1} parent=1 // pred_check
      _
    $region3: #{kent_loss.1} parent=1 // pred_check_branch
      %9 = sbr.rel (0) target = $region5
    $region4: #{kent_loss.1} parent=1 // pred_region
      _
    $region5: #{kent_loss.1} parent=1 // pred_fallthru
      _
    // Predicated region
    $region6: #{kent_loss.1} parent=1 // pred_check
      _
    $region7: #{kent_loss.1} parent=1 // pred_check_branch
      %11 = sbr.rel (0) target = $region9
    $region8: #{kent_loss.1} parent=1 // pred_region
      _
    $region9: #{kent_loss.1} parent=1 // pred_fallthru
      _
    %p12 = scmp.eq.s32.totalorder 0, 0
    // Predicated region
    $region10: #{kent_loss.1} parent=1 // pred_check
      %p13 = pneg %p12
    $region11: #{kent_loss.1} parent=1 // pred_check_branch
      %15 = sbr.rel (%p13) target = $region13
    $region12: #{kent_loss.1} parent=1 // pred_region
      %16 = vst [vmem:[#allocation2] sm:$0xff] 0.0
      %17 = vst [vmem:[#allocation3] sm:$0xff] 0.0
    $region13: #{kent_loss.1} parent=1 // pred_fallthru
      _
    %v18 = vld [vmem:[%s0] sm:$0xff]
    %v19 = vld [vmem:[%s1] sm:$0xff]
    %v20 = vsub.f32 %v18, %v19
    %v21 = vld [vmem:[#allocation2] sm:$0xff]
    %v22 = vmul.f32 %v20, %v20
    %v23 = vadd.f32 %v22, 0.0
    %v24 = vadd.f32 %v21, %v23
    %25 = vst [vmem:[#allocation2] sm:$0xff] %v24
    %v26 = vld [vmem:[#allocation3] sm:$0xff]
    %v27 = vand.u32 2147483647, %v18
    %v28 = vadd.f32 %v27, 0.0
    %v29 = vadd.f32 %v26, %v28
    %30 = vst [vmem:[#allocation3] sm:$0xff] %v29
    // Predicated region
    $region14: #{kent_loss.1} parent=1 // pred_check
      %p31 = pneg %p12
    $region15: #{kent_loss.1} parent=1 // pred_check_branch
      %33 = sbr.rel (%p31) target = $region17
    $region16: #{kent_loss.1} parent=1 // pred_region
      %v34 = vlaneseq
      %v35 = vand.u32 %v34, 127
      %vm36 = vcmp.lt.s32.totalorder %v35, 0
      %v37 = vsub.s32 0, %v35
      %v38 = vsel %vm36, %v37, %v35
      %v39 = vshrl.u32 %v38, 1
      %v40 = vand.u32 %v38, 1
      %v41 = vsub.s32 0, %v40
      %v42 = vsel %vm36, %v41, %v40
      %vm43 = vcmp.ne.s32.totalorder %v42, 0
      %vm44 = vcmp.lt.s32.totalorder %v42, 0
      %vm45 = vmand %vm44, %vm43
      %v46 = vadd.s32 %v42, 2
      %v47 = vsel %vm45, %v46, %v42
      %vm48 = vcmp.eq.s32.totalorder %v47, 0
      %v49 = vld [vmem:[#allocation2] sm:$0xff]
      %v50 = vsel %vm48, %v49, 0.0
      %51 = vadd.xlane.f32.xlu0 %v50
      %v52 = vpop.xlane.xlu0 %51
      %v53 = vrot.slane %v52, 4
      %v54 = vadd.f32 %v52, %v53
      %v55 = vrot.slane %v54, 2
      %v56 = vadd.f32 %v54, %v55
      %v57 = vrot.slane %v56, 1
      %v58 = vadd.f32 %v56, %v57
      %s59 = vtos %v58
      %60 = vadd.xlane.f32.xlu0 %v49
      %v61 = vpop.xlane.xlu0 %60
      %v62 = vrot.slane %v61, 4
      %v63 = vadd.f32 %v61, %v62
      %v64 = vrot.slane %v63, 2
      %v65 = vadd.f32 %v63, %v64
      %v66 = vrot.slane %v65, 1
      %v67 = vadd.f32 %v65, %v66
      %s68 = vtos %v67
      %s69 = ssub.f32 %s68, %s59
      %v70 = vld [vmem:[#allocation3] sm:$0xff]
      %v71 = vsel %vm48, %v70, 0.0
      %72 = vadd.xlane.f32.xlu0 %v71
      %v73 = vpop.xlane.xlu0 %72
      %v74 = vrot.slane %v73, 4
      %v75 = vadd.f32 %v73, %v74
      %v76 = vrot.slane %v75, 2
      %v77 = vadd.f32 %v75, %v76
      %v78 = vrot.slane %v77, 1
      %v79 = vadd.f32 %v77, %v78
      %s80 = vtos %v79
      %s81 = smul.f32 %s59, 0.125
      %s82 = smul.f32 %s69, 0.125
      %s83 = smul.f32 %s80, 0.125
      %s84 = smul.f32 %s83, 0.01
      %s85 = scalar_lea.smem [#allocation4], 0
      %86 = sst [smem:[%s85]] %s81
      %s87 = scalar_lea.smem [#allocation4], 1
      %88 = sst [smem:[%s87]] %s82
      %s89 = scalar_lea.smem [#allocation4], 2
      %90 = sst [smem:[%s89]] %s84
      %s91 = sadd.f32 %s81, %s82
      %s92 = sadd.f32 %s91, %s84
      %s93 = scalar_lea.smem [#allocation4], 3
      %94 = sst [smem:[%s93]] %s92
    $region17: #{kent_loss.1} parent=1 // pred_fallthru
      _
    // Predicated region
    $region18: #{kent_loss.1} parent=1 // pred_check
      _
    $region19: #{kent_loss.1} parent=1 // pred_check_branch
      %96 = sbr.rel (0) target = $region21
    $region20: #{kent_loss.1} parent=1 // pred_region
      %s98 = ssub.s32 16, 16
      %99 = vsyncadd [#allocation5], %s98
      %s101 = sshll.u32 %s2, 4
      %s102 = int_to_ptr.vmem [resolvable:$true] %s101
      %104 = dma.smem_to_vmem [#allocation4], 16, %s102, [#allocation5]
    $region21: #{kent_loss.1} parent=1 // pred_fallthru
      _
    // Predicated region
    $region22: #{kent_loss.1} parent=1 // pred_check
      _
    $region23: #{kent_loss.1} parent=1 // pred_check_branch
      %106 = sbr.rel (0) target = $region25
    $region24: #{kent_loss.1} parent=1 // pred_region
      %107 = dma.done [#allocation5], 16
    $region25: #{kent_loss.1} parent=1 // pred_fallthru
      _
    %108 = sfence
    %109 = vsyncpa [#allocation5], 1

</llo_original>
